<compile_context>
chip_gen: v6e
topology: v6e:2x2x1
jax: 0.10.0
libtpu: 0.0.40
codegen_flags: <defaults>
</compile_context>

<pallas_src>
import math

import jax
import jax.numpy as jnp
from jax.experimental import pallas as pl
from jax.experimental.pallas import tpu as pltpu


def _diffusion_embedding_kernel(x_ref, w1_ref, b1_ref, w2_ref, b2_ref, out_ref):
    # x arrives as an unmasked (tb, E) f32 block; pack to bf16 in-kernel so the
    # MXU runs bf16 x bf16 -> f32.
    x = x_ref[...].astype(jnp.bfloat16)

    # projection1 + bias + SiLU (bias/SiLU in f32)
    h = jnp.dot(x, w1_ref[...], preferred_element_type=jnp.float32) + b1_ref[...]
    h = h * jax.nn.sigmoid(h)

    # projection2 + bias + SiLU
    y = jnp.dot(h.astype(jnp.bfloat16), w2_ref[...],
                preferred_element_type=jnp.float32) + b2_ref[...]
    y = y * jax.nn.sigmoid(y)

    out_ref[...] = y.astype(out_ref.dtype)


def build_embedding_table(num_steps, dim_half):
    # Mirrors DiffusionEmbedding._build_embedding
    steps = jnp.arange(num_steps, dtype=jnp.float32)[:, None]             # (T, 1)
    exponents = jnp.arange(dim_half, dtype=jnp.float32) / (dim_half - 1) * 4.0
    freqs = (10.0 ** exponents)[None, :]                                  # (1, D/2)
    table = steps * freqs                                                 # (T, D/2)
    return jnp.concatenate([jnp.sin(table), jnp.cos(table)], axis=1)      # (T, D)


@jax.jit
def diffusion_embedding(diffusion_step, embedding, w1_bf, b1, w2_bf, b2):
    """diffusion_step: (B,) int32 -> (B, P) f32.

    w1_bf / w2_bf are expected to already be bf16 (cast once at param setup).
    """
    # Row gather in plain JAX (tiny, layout-friendly); fused under this jit.
    x = embedding[diffusion_step.astype(jnp.int32)]                       # (B, E) f32
    bsz, emb = x.shape
    proj = w2_bf.shape[1]

    # Batch tile: whole batch at small B; 128-row tiles (parallel grid axis,
    # shards across v7x's 2 TensorCores) if batch ever grows.
    tb = bsz if bsz <= 128 else 128
    grid = (pl.cdiv(bsz, tb),)

    cost = pl.CostEstimate(
        flops=2 * bsz * emb * proj + 2 * bsz * proj * proj + 6 * bsz * proj,
        transcendentals=2 * bsz * proj,
        bytes_accessed=(x.size * 4 + w1_bf.size * 2 + w2_bf.size * 2
                        + b1.size * 4 + b2.size * 4 + bsz * proj * 4),
    )

    return pl.pallas_call(
        _diffusion_embedding_kernel,
        out_shape=jax.ShapeDtypeStruct((bsz, proj), jnp.float32),
        grid=grid,
        in_specs=[
            pl.BlockSpec((tb, emb), lambda i: (i, 0)),      # x: batch-tiled
            pl.BlockSpec((emb, proj), lambda i: (0, 0)),    # W1: resident
            pl.BlockSpec((1, proj), lambda i: (0, 0)),      # b1
            pl.BlockSpec((proj, proj), lambda i: (0, 0)),   # W2: resident
            pl.BlockSpec((1, proj), lambda i: (0, 0)),      # b2
        ],
        out_specs=pl.BlockSpec((tb, proj), lambda i: (i, 0)),
        compiler_params=pltpu.CompilerParams(
            dimension_semantics=("parallel",)),
        cost_estimate=cost,
    )(x, w1_bf, b1, w2_bf, b2)


def _torch_linear_init(key, fan_in, fan_out):
    # Deterministic init mimicking nn.Linear defaults (uniform +- 1/sqrt(fan_in)).
    kw, kb = jax.random.split(key)
    bound = 1.0 / math.sqrt(fan_in)
    w = jax.random.uniform(kw, (fan_in, fan_out), jnp.float32, -bound, bound)
    b = jax.random.uniform(kb, (1, fan_out), jnp.float32, -bound, bound)
    return w, b


if __name__ == "__main__":
    num_steps = 50
    embedding_dim = 128
    projection_dim = 128
    batch = 8

    key = jax.random.PRNGKey(0)
    k_steps, k1, k2 = jax.random.split(key, 3)

    embedding = build_embedding_table(num_steps, embedding_dim // 2)
    w1, b1 = _torch_linear_init(k1, embedding_dim, projection_dim)
    w2, b2 = _torch_linear_init(k2, projection_dim, projection_dim)

    # One-time bf16 cast of the weights (NOT per call) — this is the
    # parameter-creation-time cast recommended by the perf review.
    w1_bf = jax.block_until_ready(w1.astype(jnp.bfloat16))
    w2_bf = jax.block_until_ready(w2.astype(jnp.bfloat16))

    diffusion_step = jax.random.randint(k_steps, (batch,), 0, num_steps, jnp.int32)

    out = diffusion_embedding(diffusion_step, embedding, w1_bf, b1, w2_bf, b2)
    out = jax.block_until_ready(out)

    # Pure-JAX f32 reference of the same forward pass.
    x_ref = embedding[diffusion_step]
    h_ref = x_ref @ w1 + b1
    h_ref = h_ref * jax.nn.sigmoid(h_ref)
    y_ref = h_ref @ w2 + b2
    y_ref = y_ref * jax.nn.sigmoid(y_ref)

    assert out.shape == (batch, projection_dim)
    # Tolerance relaxed vs the pure-f32 reference because the kernel uses
    # bf16 MXU operands (f32 accumulation keeps the error at the ~1e-3 level).
    assert jnp.allclose(out, y_ref, atol=2e-2, rtol=2e-2), (
        float(jnp.max(jnp.abs(out - y_ref))))
    print("KERNEL_OK")
</pallas_src>

<mosaic_0001>
module attributes {stable_mosaic.version = 11 : i64} {
  func.func @_diffusion_embedding_kernel(%arg0: i32, %arg1: memref<8x128xf32, #tpu.memory_space<vmem>>, %arg2: memref<128x128xbf16, #tpu.memory_space<vmem>>, %arg3: memref<1x128xf32, #tpu.memory_space<vmem>>, %arg4: memref<128x128xbf16, #tpu.memory_space<vmem>>, %arg5: memref<1x128xf32, #tpu.memory_space<vmem>>, %arg6: memref<8x128xf32, #tpu.memory_space<vmem>>) attributes {dimension_semantics = [#tpu.dimension_semantics<parallel>], iteration_bounds = array<i64: 1>, scalar_prefetch = 0 : i64, scratch_operands = 0 : i64, tpu.core_type = #tpu.core_type<tc>, window_params = [{transform_indices = @transform_0, window_bounds = array<i64: 8, 128>}, {pipeline_mode = #tpu.pipeline_mode<synchronous>, transform_indices = @transform_1, window_bounds = array<i64: 128, 128>}, {pipeline_mode = #tpu.pipeline_mode<synchronous>, transform_indices = @transform_2, window_bounds = array<i64: 1, 128>}, {pipeline_mode = #tpu.pipeline_mode<synchronous>, transform_indices = @transform_3, window_bounds = array<i64: 128, 128>}, {pipeline_mode = #tpu.pipeline_mode<synchronous>, transform_indices = @transform_4, window_bounds = array<i64: 1, 128>}, {transform_indices = @transform_5, window_bounds = array<i64: 8, 128>}]} {
    %c0 = arith.constant 0 : index
    %c0_0 = arith.constant 0 : index
    %0 = vector.load %arg1[%c0, %c0_0] : memref<8x128xf32, #tpu.memory_space<vmem>>, vector<8x128xf32>
    %1 = arith.truncf %0 : vector<8x128xf32> to vector<8x128xbf16>
    %c0_1 = arith.constant 0 : index
    %c0_2 = arith.constant 0 : index
    %2 = vector.load %arg2[%c0_1, %c0_2] : memref<128x128xbf16, #tpu.memory_space<vmem>>, vector<128x128xbf16>
    %cst = arith.constant dense<0.000000e+00> : vector<8x128xf32>
    %3 = tpu.matmul %1, %2, %cst {dimension_numbers = #tpu.dot_dimension_numbers<[1], [0], [0], [1], [0, 0, 1, 1], [], []>} : vector<8x128xbf16>, vector<128x128xbf16>, vector<8x128xf32> -> vector<8x128xf32>
    %c0_3 = arith.constant 0 : index
    %c0_4 = arith.constant 0 : index
    %4 = vector.load %arg3[%c0_3, %c0_4] : memref<1x128xf32, #tpu.memory_space<vmem>>, vector<1x128xf32>
    %5 = vector.broadcast %4 : vector<1x128xf32> to vector<8x128xf32>
    %6 = arith.addf %3, %5 : vector<8x128xf32>
    %7 = arith.negf %6 : vector<8x128xf32>
    %8 = math.exp %7 : vector<8x128xf32>
    %cst_5 = arith.constant 1.000000e+00 : f32
    %9 = vector.broadcast %cst_5 : f32 to vector<8x128xf32>
    %10 = arith.addf %9, %8 : vector<8x128xf32>
    %11 = arith.divf %9, %10 : vector<8x128xf32>
    %12 = arith.mulf %6, %11 : vector<8x128xf32>
    %13 = arith.truncf %12 : vector<8x128xf32> to vector<8x128xbf16>
    %c0_6 = arith.constant 0 : index
    %c0_7 = arith.constant 0 : index
    %14 = vector.load %arg4[%c0_6, %c0_7] : memref<128x128xbf16, #tpu.memory_space<vmem>>, vector<128x128xbf16>
    %cst_8 = arith.constant dense<0.000000e+00> : vector<8x128xf32>
    %15 = tpu.matmul %13, %14, %cst_8 {dimension_numbers = #tpu.dot_dimension_numbers<[1], [0], [0], [1], [0, 0, 1, 1], [], []>} : vector<8x128xbf16>, vector<128x128xbf16>, vector<8x128xf32> -> vector<8x128xf32>
    %c0_9 = arith.constant 0 : index
    %c0_10 = arith.constant 0 : index
    %16 = vector.load %arg5[%c0_9, %c0_10] : memref<1x128xf32, #tpu.memory_space<vmem>>, vector<1x128xf32>
    %17 = vector.broadcast %16 : vector<1x128xf32> to vector<8x128xf32>
    %18 = arith.addf %15, %17 : vector<8x128xf32>
    %19 = arith.negf %18 : vector<8x128xf32>
    %20 = math.exp %19 : vector<8x128xf32>
    %cst_11 = arith.constant 1.000000e+00 : f32
    %21 = vector.broadcast %cst_11 : f32 to vector<8x128xf32>
    %22 = arith.addf %21, %20 : vector<8x128xf32>
    %23 = arith.divf %21, %22 : vector<8x128xf32>
    %24 = arith.mulf %18, %23 : vector<8x128xf32>
    %c0_12 = arith.constant 0 : index
    %c0_13 = arith.constant 0 : index
    %25 = vector.load %arg6[%c0_12, %c0_13] : memref<8x128xf32, #tpu.memory_space<vmem>>, vector<8x128xf32>
    tpu.vector_store %arg6[%c0_12, %c0_13], %24 {strides = array<i32>} : memref<8x128xf32, #tpu.memory_space<vmem>>, vector<8x128xf32>,
    return
  }
  func.func @transform_0(%arg0: i32) -> (i32, i32) {
    %c0_i32 = arith.constant 0 : i32
    %c0_i32_0 = arith.constant 0 : i32
    return %arg0, %c0_i32 : i32, i32
  }
  func.func @transform_1(%arg0: i32) -> (i32, i32) {
    %c0_i32 = arith.constant 0 : i32
    %c0_i32_0 = arith.constant 0 : i32
    %c0_i32_1 = arith.constant 0 : i32
    return %c0_i32, %c0_i32_0 : i32, i32
  }
  func.func @transform_2(%arg0: i32) -> (i32, i32) {
    %c0_i32 = arith.constant 0 : i32
    %c0_i32_0 = arith.constant 0 : i32
    %c0_i32_1 = arith.constant 0 : i32
    return %c0_i32, %c0_i32_0 : i32, i32
  }
  func.func @transform_3(%arg0: i32) -> (i32, i32) {
    %c0_i32 = arith.constant 0 : i32
    %c0_i32_0 = arith.constant 0 : i32
    %c0_i32_1 = arith.constant 0 : i32
    return %c0_i32, %c0_i32_0 : i32, i32
  }
  func.func @transform_4(%arg0: i32) -> (i32, i32) {
    %c0_i32 = arith.constant 0 : i32
    %c0_i32_0 = arith.constant 0 : i32
    %c0_i32_1 = arith.constant 0 : i32
    return %c0_i32, %c0_i32_0 : i32, i32
  }
  func.func @transform_5(%arg0: i32) -> (i32, i32) {
    %c0_i32 = arith.constant 0 : i32
    %c0_i32_0 = arith.constant 0 : i32
    return %arg0, %c0_i32 : i32, i32
  }
}

</mosaic_0001>

<llo_original>
// kernel: diffusion_embedding.1
$region0: #{diffusion_embedding.1}
  #allocation0 [shape = 'u32[]', space=smem, size = 0x4, offset = 0x4, fixed_abs, tag = 'smem constant byte address 0x4 - core index']
  #allocation1 [shape = 'u32[144,128]{1,0:T(1,128)}', space=vmem, size = 0x12000, scoped, tag = 'internal scratch']
  %s0 = inlined_call_operand.vmem [shape: f32[8,128], index: 0, kind: input, shape index: {}]
  %s1 = inlined_call_operand.vmem [shape: bf16[128,128], index: 1, kind: input, shape index: {}]
  %s2 = inlined_call_operand.vmem [shape: f32[1,128], index: 2, kind: input, shape index: {}]
  %s3 = inlined_call_operand.hbm [shape: bf16[128,128], index: 3, kind: input, shape index: {}]
  %s4 = inlined_call_operand.vmem [shape: f32[1,128], index: 4, kind: input, shape index: {}]
  %s5 = inlined_call_operand.hbm [shape: f32[8,128], index: 5, kind: output, shape index: {}]
  %s6 = sld [smem:[#allocation0]]
  $region34: #{diffusion_embedding.1} parent=0
    _
  %s8 = ssub.s32 1, %s6
  %s9 = scalar_select 0, %s8, %s6
  $region1: #{diffusion_embedding.1} parent=0
    #allocation2 [shape = 'u8[32768]{0}', space=vmem, size = 0x8000, scoped, tag = 'input window, operand 3, single buffered']
    #allocation3 [shape = 's32[1]{0}', space=sflag, size = 0x4, scoped, tag = 'scoped memory for diffusion_embedding.1']
    #allocation4 [shape = 's32[1]{0}', space=sflag, size = 0x4, scoped, tag = 'scoped memory for diffusion_embedding.1']
    #allocation5 [shape = 'u8[4096]{0}', space=vmem, size = 0x1000, scoped, tag = 'output window, operand 0, single buffered']
    %10 = vsyncpa [#allocation3], 0
    %11 = vsyncpa [#allocation4], 0
    // Predicated region
    $region2: #{diffusion_embedding.1} parent=1 // pred_check
      _
    $region3: #{diffusion_embedding.1} parent=1 // pred_check_branch
      %13 = sbr.rel (0) target = $region5
    $region4: #{diffusion_embedding.1} parent=1 // pred_region
      _
    $region5: #{diffusion_embedding.1} parent=1 // pred_fallthru
      _
    // Predicated region
    $region6: #{diffusion_embedding.1} parent=1 // pred_check
      _
    $region7: #{diffusion_embedding.1} parent=1 // pred_check_branch
      %15 = sbr.rel (0) target = $region9
    $region8: #{diffusion_embedding.1} parent=1 // pred_region
      _
    $region9: #{diffusion_embedding.1} parent=1 // pred_fallthru
      _
    // Predicated region
    $region10: #{diffusion_embedding.1} parent=1 // pred_check
      _
    $region11: #{diffusion_embedding.1} parent=1 // pred_check_branch
      %17 = sbr.rel (0) target = $region13
    $region12: #{diffusion_embedding.1} parent=1 // pred_region
      _
    $region13: #{diffusion_embedding.1} parent=1 // pred_fallthru
      _
    // Predicated region
    $region14: #{diffusion_embedding.1} parent=1 // pred_check
      _
    $region15: #{diffusion_embedding.1} parent=1 // pred_check_branch
      %19 = sbr.rel (0) target = $region17
    $region16: #{diffusion_embedding.1} parent=1 // pred_region
      %s21 = ssub.s32 1024, 1024
      %22 = vsyncadd [#allocation3], %s21
      %s23 = sshll.u32 [#allocation2], 4
      %s24 = int_to_ptr.vmem [resolvable:$true] %s23
      %29 = dma.hbm_to_vmem [thread:$0]  %s3, 1024, %s24, [#allocation3], 64, 64, 4
    $region17: #{diffusion_embedding.1} parent=1 // pred_fallthru
      _
    // Predicated region
    $region18: #{diffusion_embedding.1} parent=1 // pred_check
      _
    $region19: #{diffusion_embedding.1} parent=1 // pred_check_branch
      %31 = sbr.rel (0) target = $region21
    $region20: #{diffusion_embedding.1} parent=1 // pred_region
      _
    $region21: #{diffusion_embedding.1} parent=1 // pred_fallthru
      _
    // Predicated region
    $region22: #{diffusion_embedding.1} parent=1 // pred_check
      _
    $region23: #{diffusion_embedding.1} parent=1 // pred_check_branch
      %33 = sbr.rel (0) target = $region25
    $region24: #{diffusion_embedding.1} parent=1 // pred_region
      %34 = dma.done [#allocation3], 1024
    $region25: #{diffusion_embedding.1} parent=1 // pred_fallthru
      _
    %v36 = vld [vmem:[%s0] sm:$0xff]
    %v37 = vpack.c.bf16 %v36, %v36
    %v38 = vld [vmem:[%s1] sm:$0xf]
    %v39 = vld [vmem:[%s1 + $0x4] sm:$0xf]
    %v40 = vld [vmem:[%s1 + $0x8] sm:$0xf]
    %v41 = vld [vmem:[%s1 + $0xc] sm:$0xf]
    %v42 = vld [vmem:[%s1 + $0x10] sm:$0xf]
    %v43 = vld [vmem:[%s1 + $0x14] sm:$0xf]
    %v44 = vld [vmem:[%s1 + $0x18] sm:$0xf]
    %v45 = vld [vmem:[%s1 + $0x1c] sm:$0xf]
    %v46 = vld [vmem:[%s1 + $0x20] sm:$0xf]
    %v47 = vld [vmem:[%s1 + $0x24] sm:$0xf]
    %v48 = vld [vmem:[%s1 + $0x28] sm:$0xf]
    %v49 = vld [vmem:[%s1 + $0x2c] sm:$0xf]
    %v50 = vld [vmem:[%s1 + $0x30] sm:$0xf]
    %v51 = vld [vmem:[%s1 + $0x34] sm:$0xf]
    %v52 = vld [vmem:[%s1 + $0x38] sm:$0xf]
    %v53 = vld [vmem:[%s1 + $0x3c] sm:$0xf]
    %v54 = vld [vmem:[%s2] sm:$0x1]
    %v56 = vlaneseq
    %v57 = vshrl.u32 %v56, 7
    %v58 = vsub.s32 0, %v57
    %v59 = vrot.slane %v54, %v58
    %v77 = vunpack.c.l.b16 %v38
    %v78 = vunpack.c.l.b16 %v39
    %v79 = vunpack.c.l.b16 %v40
    %v80 = vunpack.c.l.b16 %v41
    %v81 = vunpack.c.l.b16 %v42
    %v82 = vunpack.c.l.b16 %v43
    %v83 = vunpack.c.l.b16 %v44
    %v84 = vunpack.c.l.b16 %v45
    %v85 = vunpack.c.l.b16 %v46
    %v86 = vunpack.c.l.b16 %v47
    %v87 = vunpack.c.l.b16 %v48
    %v88 = vunpack.c.l.b16 %v49
    %v89 = vunpack.c.l.b16 %v50
    %v90 = vunpack.c.l.b16 %v51
    %v91 = vunpack.c.l.b16 %v52
    %v92 = vunpack.c.l.b16 %v53
    %v93 = vpack.c.b16 %v78, %v77
    %v94 = vpack.c.b16 %v80, %v79
    %v95 = vpack.c.b16 %v82, %v81
    %v96 = vpack.c.b16 %v84, %v83
    %v97 = vpack.c.b16 %v86, %v85
    %v98 = vpack.c.b16 %v88, %v87
    %v99 = vpack.c.b16 %v90, %v89
    %v100 = vpack.c.b16 %v92, %v91
    %109 = vmatprep.subr.bf16.mxu0 0
    %110 = vmatpush1.bf16.msra.mxu0 %v100
    %111 = vmatprep.subr.bf16.mxu0 0
    %112 = vmatpush1.bf16.msra.mxu0 %v99
    %113 = vmatprep.subr.bf16.mxu0 0
    %114 = vmatpush1.bf16.msra.mxu0 %v98
    %115 = vmatprep.subr.bf16.mxu0 0
    %116 = vmatpush1.bf16.msra.mxu0 %v97
    %117 = vmatprep.subr.bf16.mxu0 0
    %118 = vmatpush1.bf16.msra.mxu0 %v96
    %119 = vmatprep.subr.bf16.mxu0 0
    %120 = vmatpush1.bf16.msra.mxu0 %v95
    %121 = vmatprep.subr.bf16.mxu0 0
    %122 = vmatpush1.bf16.msra.mxu0 %v94
    %123 = vmatprep.subr.bf16.mxu0 0
    %124 = vmatpush1.bf16.msra.mxu0 %v93
    %125 = vmatprep.subr.bf16.mxu0 0
    %126 = vmatpush2.bf16.msra.mxu0 0
    %127 = vmatprep.subr.bf16.mxu0 0
    %128 = vmatpush2.bf16.msra.mxu0 0
    %129 = vmatprep.subr.bf16.mxu0 0
    %130 = vmatpush2.bf16.msra.mxu0 0
    %131 = vmatprep.subr.bf16.mxu0 0
    %132 = vmatpush2.bf16.msra.mxu0 0
    %133 = vmatprep.subr.bf16.mxu0 0
    %134 = vmatpush2.bf16.msra.mxu0 0
    %135 = vmatprep.subr.bf16.mxu0 0
    %136 = vmatpush2.bf16.msra.mxu0 0
    %137 = vmatprep.subr.bf16.mxu0 0
    %138 = vmatpush2.bf16.msra.mxu0 0
    %139 = vmatprep.subr.bf16.mxu0 0
    %140 = vmatpush2.bf16.msra.mxu0 0
    %141 = vmatprep.mubr.bf16.mxu0 0
    %142 = vmatmul.mubr.bf16.gmra.mxu0 %v37
    %v143 = vpop.f32.mrf.mxu0
    %v144 = vadd.f32 %v59, %v143
    %v145 = vpop.f32.mrf.mxu0
    %v146 = vpop.f32.mrf.mxu0
    %v147 = vpop.f32.mrf.mxu0
    %148 = vdwg.mxu0
    %v149 = vxor.u32 %v144, 2147483648
    %v150 = vmul.f32 %v149, 1.442695
    %v151 = vpow.pop %v150
    %v152 = vadd.f32 %v151, 1.0
    %v153 = vrcp.pop %v152
    %v154 = vmul.f32 1.0, %v153
    %v155 = vmul.f32 %v144, %v154
    %v156 = vpack.c.bf16 %v155, %v155
    %v157 = vld [vmem:[#allocation2] sm:$0xf]
    %v158 = vld [vmem:[#allocation2 + $0x4] sm:$0xf]
    %v159 = vld [vmem:[#allocation2 + $0x8] sm:$0xf]
    %v160 = vld [vmem:[#allocation2 + $0xc] sm:$0xf]
    %v161 = vld [vmem:[#allocation2 + $0x10] sm:$0xf]
    %v162 = vld [vmem:[#allocation2 + $0x14] sm:$0xf]
    %v163 = vld [vmem:[#allocation2 + $0x18] sm:$0xf]
    %v164 = vld [vmem:[#allocation2 + $0x1c] sm:$0xf]
    %v165 = vld [vmem:[#allocation2 + $0x20] sm:$0xf]
    %v166 = vld [vmem:[#allocation2 + $0x24] sm:$0xf]
    %v167 = vld [vmem:[#allocation2 + $0x28] sm:$0xf]
    %v168 = vld [vmem:[#allocation2 + $0x2c] sm:$0xf]
    %v169 = vld [vmem:[#allocation2 + $0x30] sm:$0xf]
    %v170 = vld [vmem:[#allocation2 + $0x34] sm:$0xf]
    %v171 = vld [vmem:[#allocation2 + $0x38] sm:$0xf]
    %v172 = vld [vmem:[#allocation2 + $0x3c] sm:$0xf]
    %v173 = vld [vmem:[%s4] sm:$0x1]
    %v175 = vlaneseq
    %v176 = vshrl.u32 %v175, 7
    %v177 = vsub.s32 0, %v176
    %v178 = vrot.slane %v173, %v177
    %v196 = vunpack.c.l.b16 %v157
    %v197 = vunpack.c.l.b16 %v158
    %v198 = vunpack.c.l.b16 %v159
    %v199 = vunpack.c.l.b16 %v160
    %v200 = vunpack.c.l.b16 %v161
    %v201 = vunpack.c.l.b16 %v162
    %v202 = vunpack.c.l.b16 %v163
    %v203 = vunpack.c.l.b16 %v164
    %v204 = vunpack.c.l.b16 %v165
    %v205 = vunpack.c.l.b16 %v166
    %v206 = vunpack.c.l.b16 %v167
    %v207 = vunpack.c.l.b16 %v168
    %v208 = vunpack.c.l.b16 %v169
    %v209 = vunpack.c.l.b16 %v170
    %v210 = vunpack.c.l.b16 %v171
    %v211 = vunpack.c.l.b16 %v172
    %v212 = vpack.c.b16 %v197, %v196
    %v213 = vpack.c.b16 %v199, %v198
    %v214 = vpack.c.b16 %v201, %v200
    %v215 = vpack.c.b16 %v203, %v202
    %v216 = vpack.c.b16 %v205, %v204
    %v217 = vpack.c.b16 %v207, %v206
    %v218 = vpack.c.b16 %v209, %v208
    %v219 = vpack.c.b16 %v211, %v210
    %228 = vmatprep.subr.bf16.mxu0 0
    %229 = vmatpush1.bf16.msra.mxu0 %v219
    %230 = vmatprep.subr.bf16.mxu0 0
    %231 = vmatpush1.bf16.msra.mxu0 %v218
    %232 = vmatprep.subr.bf16.mxu0 0
    %233 = vmatpush1.bf16.msra.mxu0 %v217
    %234 = vmatprep.subr.bf16.mxu0 0
    %235 = vmatpush1.bf16.msra.mxu0 %v216
    %236 = vmatprep.subr.bf16.mxu0 0
    %237 = vmatpush1.bf16.msra.mxu0 %v215
    %238 = vmatprep.subr.bf16.mxu0 0
    %239 = vmatpush1.bf16.msra.mxu0 %v214
    %240 = vmatprep.subr.bf16.mxu0 0
    %241 = vmatpush1.bf16.msra.mxu0 %v213
    %242 = vmatprep.subr.bf16.mxu0 0
    %243 = vmatpush1.bf16.msra.mxu0 %v212
    %244 = vmatprep.subr.bf16.mxu0 0
    %245 = vmatpush2.bf16.msra.mxu0 0
    %246 = vmatprep.subr.bf16.mxu0 0
    %247 = vmatpush2.bf16.msra.mxu0 0
    %248 = vmatprep.subr.bf16.mxu0 0
    %249 = vmatpush2.bf16.msra.mxu0 0
    %250 = vmatprep.subr.bf16.mxu0 0
    %251 = vmatpush2.bf16.msra.mxu0 0
    %252 = vmatprep.subr.bf16.mxu0 0
    %253 = vmatpush2.bf16.msra.mxu0 0
    %254 = vmatprep.subr.bf16.mxu0 0
    %255 = vmatpush2.bf16.msra.mxu0 0
    %256 = vmatprep.subr.bf16.mxu0 0
    %257 = vmatpush2.bf16.msra.mxu0 0
    %258 = vmatprep.subr.bf16.mxu0 0
    %259 = vmatpush2.bf16.msra.mxu0 0
    %260 = vmatprep.mubr.bf16.mxu0 0
    %261 = vmatmul.mubr.bf16.gmra.mxu0 %v156
    %v262 = vpop.f32.mrf.mxu0
    %v263 = vadd.f32 %v178, %v262
    %v264 = vpop.f32.mrf.mxu0
    %v265 = vpop.f32.mrf.mxu0
    %v266 = vpop.f32.mrf.mxu0
    %267 = vdwg.mxu0
    %v268 = vxor.u32 %v263, 2147483648
    %v269 = vmul.f32 %v268, 1.442695
    %v270 = vpow.pop %v269
    %v271 = vadd.f32 %v270, 1.0
    %v272 = vrcp.pop %v271
    %v273 = vmul.f32 1.0, %v272
    %v274 = vmul.f32 %v263, %v273
    %275 = vst [vmem:[#allocation5] sm:$0xff] %v274
    // Predicated region
    $region26: #{diffusion_embedding.1} parent=1 // pred_check
      _
    $region27: #{diffusion_embedding.1} parent=1 // pred_check_branch
      %277 = sbr.rel (0) target = $region29
    $region28: #{diffusion_embedding.1} parent=1 // pred_region
      %s279 = ssub.s32 128, 128
      %280 = vsyncadd [#allocation4], %s279
      %s282 = sshll.u32 [#allocation5], 4
      %s283 = int_to_ptr.vmem [resolvable:$true] %s282
      %285 = dma.vmem_to_hbm [thread:$0]  %s283, 128, %s5, [#allocation4]
    $region29: #{diffusion_embedding.1} parent=1 // pred_fallthru
      _
    // Predicated region
    $region30: #{diffusion_embedding.1} parent=1 // pred_check
      _
    $region31: #{diffusion_embedding.1} parent=1 // pred_check_branch
      %287 = sbr.rel (0) target = $region33
    $region32: #{diffusion_embedding.1} parent=1 // pred_region
      %288 = dma.done [#allocation4], 128
    $region33: #{diffusion_embedding.1} parent=1 // pred_fallthru
      _
    %289 = vsyncpa [#allocation3], 1
    %290 = vsyncpa [#allocation4], 1

</llo_original>
